<compile_context>
chip_gen: v7x
topology: tpu7x:2x2x1
jax: 0.10.0
libtpu: 0.0.40
codegen_flags: <defaults>
</compile_context>

<pallas_src>
import jax
import jax.numpy as jnp
from jax.experimental import pallas as pl
from jax.experimental.pallas import tpu as pltpu


def _make_kernel(KH, Ho):
    def kernel(x_ref, w_ref, b_ref, o_ref):
        # x_ref: (1, Hp, Wp*C)   padded input rows of one image (compute dtype)
        # w_ref: (KH, Wp*C, Wo*O) row-lowered sparsified weight  (compute dtype)
        # b_ref: (1, Wo*O)        bias tiled along the lane axis (f32)
        # o_ref: (Ho, Wo*O)       one image's output, channels-minor (f32)
        acc = jnp.zeros(o_ref.shape, jnp.float32)
        for kh in range(KH):  # static unroll (KH == 3)
            x_slab = x_ref[0, pl.ds(kh, Ho), :]               # (Ho, Wp*C)
            acc = acc + jnp.dot(x_slab, w_ref[kh],
                                preferred_element_type=jnp.float32)
        o_ref[...] = (acc + b_ref[...]).astype(o_ref.dtype)
    return kernel


def sparse_conv_forward(x, weight, bias, r, *, stride=1, padding=1,
                        compute_dtype=jnp.bfloat16):
    """Pallas SparseConv.forward (groups=1, stride=1 conv)."""
    N, C, H, W = x.shape
    O, Cw, KH, KW = weight.shape
    assert C == Cw
    assert stride == 1  # TODO(synk): generalize to strided / grouped convs.

    # ---- weight sparsification prologue (288 elems, f32, done once) ----
    w_c = weight - jnp.mean(weight)           # conv.weight.data - mean
    rr = jnp.clip(r, 0.0, 5.0)                # torch.clamp(self.r, 0, 5)
    std = jnp.std(w_c, ddof=1)                # torch .std() default (unbiased)
    scale = rr * std + 1e-6                   # (l + 1e-6)
    nw = w_c / scale
    sw = jnp.where(jnp.abs(nw) > 1.0, nw, 0.0)   # hardshrink(nw, 1), strict
    w_eff = scale * sw                        # m == 0 -> w = (l + 1e-6) * sw

    Hp = H + 2 * padding
    Wp = W + 2 * padding
    Ho = Hp - KH + 1
    Wo = Wp - KW + 1

    # ---- row-lowered weight: (KH, Wp*C, Wo*O) block-banded matrix ----
    # w_row[kh, w_in*C + c, w_out*O + o] = w_eff[o, c, kh, w_in - w_out]
    #                                      if 0 <= w_in - w_out < KW else 0
    # This bakes im2col-along-width *and* the lane-dense output layout into
    # the weight, so the kernel is just KH plain matmuls.
    w_t = jnp.transpose(w_eff, (2, 3, 1, 0))                    # (KH, KW, C, O)
    kw_idx = jnp.arange(Wp)[:, None] - jnp.arange(Wo)[None, :]  # (Wp, Wo)
    valid = (kw_idx >= 0) & (kw_idx < KW)
    big = w_t[:, jnp.clip(kw_idx, 0, KW - 1), :, :]             # (KH, Wp, Wo, C, O)
    big = jnp.where(valid[None, :, :, None, None], big, 0.0)
    w_row = jnp.transpose(big, (0, 1, 3, 2, 4)).reshape(KH, Wp * C, Wo * O)
    w_row = w_row.astype(compute_dtype)       # cast AFTER the f32 hardshrink

    # ---- padded NHWC input with width & channel merged (contiguous reshape) ----
    x_nhwc = jnp.transpose(x, (0, 2, 3, 1))
    x_pad = jnp.pad(x_nhwc, ((0, 0), (padding, padding), (padding, padding), (0, 0)))
    x2d = x_pad.reshape(N, Hp, Wp * C).astype(compute_dtype)

    # Bias pre-tiled along the 128-wide lane axis of the output tile.
    bias_row = jnp.tile(bias.astype(jnp.float32), Wo).reshape(1, Wo * O)

    kernel = _make_kernel(KH, Ho)
    out2d = pl.pallas_call(
        kernel,
        out_shape=jax.ShapeDtypeStruct((N * Ho, Wo * O), jnp.float32),
        grid_spec=pltpu.PrefetchScalarGridSpec(
            num_scalar_prefetch=0,
            grid=(N,),                                     # >= 2 parallel steps
            in_specs=[
                pl.BlockSpec((1, Hp, Wp * C), lambda n: (n, 0, 0)),     # image n
                pl.BlockSpec((KH, Wp * C, Wo * O), lambda n: (0, 0, 0)),  # weight
                pl.BlockSpec((1, Wo * O), lambda n: (0, 0)),            # bias row
            ],
            out_specs=pl.BlockSpec((Ho, Wo * O), lambda n: (n, 0)),     # lane-dense
        ),
        compiler_params=pltpu.CompilerParams(
            dimension_semantics=("parallel",)),
    )(x2d, w_row, bias_row)

    out = out2d.reshape(N, Ho, Wo, O)
    return jnp.transpose(out, (0, 3, 1, 2)).astype(x.dtype)   # back to NCHW


def _reference(x, weight, bias, r, padding=1):
    """Pure-JAX reference replicating the PyTorch forward semantics."""
    w_c = weight - jnp.mean(weight)
    rr = jnp.clip(r, 0.0, 5.0)
    std = jnp.std(w_c, ddof=1)
    scale = rr * std + 1e-6
    nw = w_c / scale
    sw = jnp.where(jnp.abs(nw) > 1.0, nw, 0.0)
    w_eff = scale * sw
    out = jax.lax.conv_general_dilated(
        x, w_eff, window_strides=(1, 1),
        padding=[(padding, padding), (padding, padding)],
        dimension_numbers=("NCHW", "OIHW", "NCHW"))
    return out + bias[None, :, None, None]


if __name__ == "__main__":
    key = jax.random.PRNGKey(0)
    k_x, k_w, k_b = jax.random.split(key, 3)

    N, C, H, W = 2, 4, 16, 16          # input (NCHW)
    O, KH, KW = 8, 3, 3                # Conv2d(4, 8, kernel_size=3, padding=1)

    x = jax.random.normal(k_x, (N, C, H, W), dtype=jnp.float32)
    fan_in = C * KH * KW
    bound = 1.0 / (fan_in ** 0.5)
    weight = jax.random.uniform(k_w, (O, C, KH, KW), jnp.float32, -bound, bound)
    bias = jax.random.uniform(k_b, (O,), jnp.float32, -bound, bound)
    r = jnp.array([0.5], dtype=jnp.float32)   # nn.Parameter(torch.Tensor([0.5]))

    ref = _reference(x, weight, bias, r[0], padding=1)

    # Strict check with f32 compute (verifies the lowered-weight formulation).
    out_f32 = sparse_conv_forward(x, weight, bias, r[0], stride=1, padding=1,
                                  compute_dtype=jnp.float32)
    out_f32 = jax.block_until_ready(out_f32)
    assert out_f32.shape == (N, O, H, W), out_f32.shape
    assert jnp.allclose(out_f32, ref, atol=1e-4, rtol=1e-4), "f32 mismatch vs reference"

    # Default bf16 path (halves HBM traffic on the bandwidth-bound streams).
    out_bf16 = sparse_conv_forward(x, weight, bias, r[0], stride=1, padding=1)
    out_bf16 = jax.block_until_ready(out_bf16)
    assert out_bf16.shape == (N, O, H, W), out_bf16.shape
    assert jnp.allclose(out_bf16, ref, atol=3e-2, rtol=3e-2), "bf16 mismatch vs reference"

    print("KERNEL_OK")
</pallas_src>

<mosaic_0001>
module attributes {stable_mosaic.version = 11 : i64} {
  func.func @kernel(%arg0: i32, %arg1: memref<1x18x72xf32, #tpu.memory_space<vmem>>, %arg2: memref<3x72x128xf32, #tpu.memory_space<vmem>>, %arg3: memref<1x128xf32, #tpu.memory_space<vmem>>, %arg4: memref<16x128xf32, #tpu.memory_space<vmem>>) attributes {dimension_semantics = [#tpu.dimension_semantics<parallel>], iteration_bounds = array<i64: 2>, scalar_prefetch = 0 : i64, scratch_operands = 0 : i64, tpu.core_type = #tpu.core_type<tc>, window_params = [{transform_indices = @transform_0, window_bounds = array<i64: 1, 18, 72>}, {pipeline_mode = #tpu.pipeline_mode<synchronous>, transform_indices = @transform_1, window_bounds = array<i64: 3, 72, 128>}, {pipeline_mode = #tpu.pipeline_mode<synchronous>, transform_indices = @transform_2, window_bounds = array<i64: 1, 128>}, {transform_indices = @transform_3, window_bounds = array<i64: 16, 128>}]} {
    %cst = arith.constant 0.000000e+00 : f32
    %0 = vector.broadcast %cst : f32 to vector<16x128xf32>
    %c0 = arith.constant 0 : index
    %c0_0 = arith.constant 0 : index
    %c0_1 = arith.constant 0 : index
    %1 = vector.load %arg1[%c0, %c0_0, %c0_1] : memref<1x18x72xf32, #tpu.memory_space<vmem>>, vector<1x16x72xf32>
    %2 = vector.shape_cast %1 : vector<1x16x72xf32> to vector<16x72xf32>
    %c0_2 = arith.constant 0 : index
    %c0_3 = arith.constant 0 : index
    %c0_4 = arith.constant 0 : index
    %3 = vector.load %arg2[%c0_2, %c0_3, %c0_4] : memref<3x72x128xf32, #tpu.memory_space<vmem>>, vector<1x72x128xf32>
    %4 = vector.shape_cast %3 : vector<1x72x128xf32> to vector<72x128xf32>
    %cst_5 = arith.constant dense<0.000000e+00> : vector<16x128xf32>
    %5 = tpu.matmul %2, %4, %cst_5 {dimension_numbers = #tpu.dot_dimension_numbers<[1], [0], [0], [1], [0, 0, 1, 1], [], []>} : vector<16x72xf32>, vector<72x128xf32>, vector<16x128xf32> -> vector<16x128xf32>
    %6 = arith.addf %0, %5 : vector<16x128xf32>
    %c0_6 = arith.constant 0 : index
    %c1 = arith.constant 1 : index
    %c0_7 = arith.constant 0 : index
    %7 = vector.load %arg1[%c0_6, %c1, %c0_7] : memref<1x18x72xf32, #tpu.memory_space<vmem>>, vector<1x16x72xf32>
    %8 = vector.shape_cast %7 : vector<1x16x72xf32> to vector<16x72xf32>
    %c1_8 = arith.constant 1 : index
    %c0_9 = arith.constant 0 : index
    %c0_10 = arith.constant 0 : index
    %9 = vector.load %arg2[%c1_8, %c0_9, %c0_10] : memref<3x72x128xf32, #tpu.memory_space<vmem>>, vector<1x72x128xf32>
    %10 = vector.shape_cast %9 : vector<1x72x128xf32> to vector<72x128xf32>
    %cst_11 = arith.constant dense<0.000000e+00> : vector<16x128xf32>
    %11 = tpu.matmul %8, %10, %cst_11 {dimension_numbers = #tpu.dot_dimension_numbers<[1], [0], [0], [1], [0, 0, 1, 1], [], []>} : vector<16x72xf32>, vector<72x128xf32>, vector<16x128xf32> -> vector<16x128xf32>
    %12 = arith.addf %6, %11 : vector<16x128xf32>
    %c0_12 = arith.constant 0 : index
    %c2 = arith.constant 2 : index
    %c0_13 = arith.constant 0 : index
    %13 = vector.load %arg1[%c0_12, %c2, %c0_13] : memref<1x18x72xf32, #tpu.memory_space<vmem>>, vector<1x16x72xf32>
    %14 = vector.shape_cast %13 : vector<1x16x72xf32> to vector<16x72xf32>
    %c2_14 = arith.constant 2 : index
    %c0_15 = arith.constant 0 : index
    %c0_16 = arith.constant 0 : index
    %15 = vector.load %arg2[%c2_14, %c0_15, %c0_16] : memref<3x72x128xf32, #tpu.memory_space<vmem>>, vector<1x72x128xf32>
    %16 = vector.shape_cast %15 : vector<1x72x128xf32> to vector<72x128xf32>
    %cst_17 = arith.constant dense<0.000000e+00> : vector<16x128xf32>
    %17 = tpu.matmul %14, %16, %cst_17 {dimension_numbers = #tpu.dot_dimension_numbers<[1], [0], [0], [1], [0, 0, 1, 1], [], []>} : vector<16x72xf32>, vector<72x128xf32>, vector<16x128xf32> -> vector<16x128xf32>
    %18 = arith.addf %12, %17 : vector<16x128xf32>
    %c0_18 = arith.constant 0 : index
    %c0_19 = arith.constant 0 : index
    %19 = vector.load %arg3[%c0_18, %c0_19] : memref<1x128xf32, #tpu.memory_space<vmem>>, vector<1x128xf32>
    %20 = vector.broadcast %19 : vector<1x128xf32> to vector<16x128xf32>
    %21 = arith.addf %18, %20 : vector<16x128xf32>
    %c0_20 = arith.constant 0 : index
    %c0_21 = arith.constant 0 : index
    %22 = vector.load %arg4[%c0_20, %c0_21] : memref<16x128xf32, #tpu.memory_space<vmem>>, vector<16x128xf32>
    tpu.vector_store %arg4[%c0_20, %c0_21], %21 {strides = array<i32>} : memref<16x128xf32, #tpu.memory_space<vmem>>, vector<16x128xf32>,
    return
  }
  func.func @transform_0(%arg0: i32) -> (i32, i32, i32) {
    %c0_i32 = arith.constant 0 : i32
    %c0_i32_0 = arith.constant 0 : i32
    %c0_i32_1 = arith.constant 0 : i32
    return %arg0, %c0_i32, %c0_i32_0 : i32, i32, i32
  }
  func.func @transform_1(%arg0: i32) -> (i32, i32, i32) {
    %c0_i32 = arith.constant 0 : i32
    %c0_i32_0 = arith.constant 0 : i32
    %c0_i32_1 = arith.constant 0 : i32
    %c0_i32_2 = arith.constant 0 : i32
    return %c0_i32, %c0_i32_0, %c0_i32_1 : i32, i32, i32
  }
  func.func @transform_2(%arg0: i32) -> (i32, i32) {
    %c0_i32 = arith.constant 0 : i32
    %c0_i32_0 = arith.constant 0 : i32
    %c0_i32_1 = arith.constant 0 : i32
    return %c0_i32, %c0_i32_0 : i32, i32
  }
  func.func @transform_3(%arg0: i32) -> (i32, i32) {
    %c0_i32 = arith.constant 0 : i32
    %c0_i32_0 = arith.constant 0 : i32
    return %arg0, %c0_i32 : i32, i32
  }
}

</mosaic_0001>

<llo_original>
// kernel: tpu_custom_call.1
$region0: #{tpu_custom_call.1}
  #allocation0 [shape = 'u32[]', space=smem, size = 0x4, offset = 0x4, fixed_abs, tag = 'smem constant byte address 0x4 - core index']
  #allocation1 [shape = 'u32[144,128]{1,0:T(1,128)}', space=vmem, size = 0x12000, scoped, tag = 'internal scratch']
  %s0 = inlined_call_operand.vmem [shape: f32[2,18,72], index: 0, kind: input, shape index: {}]
  %s1 = inlined_call_operand.hbm [shape: f32[3,72,128], index: 1, kind: input, shape index: {}]
  %s2 = inlined_call_operand.vmem [shape: f32[1,128], index: 2, kind: input, shape index: {}]
  %s3 = inlined_call_operand.hbm [shape: f32[32,128], index: 3, kind: output, shape index: {}]
  %s4 = sld [smem:[#allocation0]]
  $region49: #{tpu_custom_call.1} parent=0
    _
  %s6 = ssub.s32 1, %s4
  %s7 = scalar_select 0, %s6, %s4
  $region1: #{tpu_custom_call.1} parent=0
    #allocation2 [shape = 'u8[110592]{0}', space=vmem, size = 0x1b000, scoped, tag = 'input window, operand 1, single buffered']
    #allocation3 [shape = 's32[2]{0}', space=sflag, size = 0x8, scoped, tag = 'scoped memory for tpu_custom_call.1']
    #allocation4 [shape = 's32[2]{0}', space=sflag, size = 0x8, scoped, tag = 'scoped memory for tpu_custom_call.1']
    #allocation5 [shape = 'u8[16384]{0}', space=vmem, size = 0x4000, scoped, tag = 'output window, operand 0']
    %8 = vsyncpa [#allocation3], 0
    %9 = vsyncpa [#allocation4], 0
    %s10 = scalar_lea.sflag [#allocation4], 1
    %11 = vsyncpa %s10, 0
    loop: start=0, step=1, limit=4
    $region2: #{tpu_custom_call.1} parent=1 // loop_pre_header
      _
    $region3: #{tpu_custom_call.1} parent=1 // loop_header
      %s13 = sphi 0, %s17
      %p14 = scmp.ge.s32.totalorder %s13, 4
      %s23 = sphi 0, %s25
      %s26 = sphi 0, %s23
      %s27 = sphi 0, %s26
      %s43 = sphi 0, %s27
      %s47 = sphi 0, %s47
      %s49 = sphi 0, %s47
      %s50 = sphi 0, %s49
      %s64 = sphi 0, %s50
      %s68 = sphi 0, %s68
      %s70 = sphi 0, %s68
      %s71 = sphi 0, %s70
      %s85 = sphi 0, %s71
      %s91 = sphi 0, %s93
      %s94 = sphi 0, %s91
      %s95 = sphi 0, %s94
      %s111 = sphi 0, %s95
    $region4: #{tpu_custom_call.1} parent=1 // loop_header_branch
      %16 = sbr.rel (%p14) target = $region8
    $region5: #{tpu_custom_call.1} parent=1 // loop_body
      %s18 = ssub.s32 %s13, 1
      %s19 = ssub.s32 %s13, 2
      %s20 = sadd.s32 %s13, 1
      %s21 = ssub.s32 %s13, %s20
      %p22 = scmp.eq.s32.totalorder %s21, 0
      %s24 = sadd.s32 %s23, 1
      %s25 = scalar_select %p22, %s23, %s24
      %p28 = pneg %p22
      %p29 = scmp.eq.s32.totalorder %s13, 1
      %p30 = por %p28, %p29
      %p31 = scmp.ne.s32.totalorder %s23, %s26
      %p32 = scmp.eq.s32.totalorder %s13, 0
      %p33 = por %p31, %p32
      %p34 = scmp.ne.s32.totalorder %s23, %s26
      %p35 = scmp.eq.s32.totalorder %s18, 1
      %p36 = por %p34, %p35
      %p37 = scmp.ne.s32.totalorder %s26, %s27
      %p38 = scmp.eq.s32.totalorder %s18, 0
      %p39 = por %p37, %p38
      %p40 = scmp.ne.s32.totalorder %s26, %s27
      %p41 = scmp.eq.s32.totalorder %s19, 1
      %p42 = por %p40, %p41
      %p44 = scmp.ne.s32.totalorder %s27, %s43
      %p45 = scmp.eq.s32.totalorder %s19, 0
      %p46 = por %p44, %p45
      %s48 = sadd.s32 %s47, 1
      %p51 = scmp.eq.s32.totalorder %s13, 1
      %p52 = scmp.ne.s32.totalorder %s47, %s49
      %p53 = scmp.eq.s32.totalorder %s13, 0
      %p54 = por %p52, %p53
      %p55 = scmp.ne.s32.totalorder %s47, %s49
      %p56 = scmp.eq.s32.totalorder %s18, 1
      %p57 = por %p55, %p56
      %p58 = scmp.ne.s32.totalorder %s49, %s50
      %p59 = scmp.eq.s32.totalorder %s18, 0
      %p60 = por %p58, %p59
      %p61 = scmp.ne.s32.totalorder %s49, %s50
      %p62 = scmp.eq.s32.totalorder %s19, 1
      %p63 = por %p61, %p62
      %p65 = scmp.ne.s32.totalorder %s50, %s64
      %p66 = scmp.eq.s32.totalorder %s19, 0
      %p67 = por %p65, %p66
      %s69 = sadd.s32 %s68, 1
      %p72 = scmp.eq.s32.totalorder %s13, 1
      %p73 = scmp.ne.s32.totalorder %s68, %s70
      %p74 = scmp.eq.s32.totalorder %s13, 0
      %p75 = por %p73, %p74
      %p76 = scmp.ne.s32.totalorder %s68, %s70
      %p77 = scmp.eq.s32.totalorder %s18, 1
      %p78 = por %p76, %p77
      %p79 = scmp.ne.s32.totalorder %s70, %s71
      %p80 = scmp.eq.s32.totalorder %s18, 0
      %p81 = por %p79, %p80
      %p82 = scmp.ne.s32.totalorder %s70, %s71
      %p83 = scmp.eq.s32.totalorder %s19, 1
      %p84 = por %p82, %p83
      %p86 = scmp.ne.s32.totalorder %s71, %s85
      %p87 = scmp.eq.s32.totalorder %s19, 0
      %p88 = por %p86, %p87
      %s89 = ssub.s32 %s13, %s20
      %p90 = scmp.eq.s32.totalorder %s89, 0
      %s92 = sadd.s32 %s91, 1
      %s93 = scalar_select %p90, %s91, %s92
      %p96 = pneg %p90
      %p97 = scmp.eq.s32.totalorder %s13, 1
      %p98 = por %p96, %p97
      %p99 = scmp.ne.s32.totalorder %s91, %s94
      %p100 = scmp.eq.s32.totalorder %s13, 0
      %p101 = por %p99, %p100
      %p102 = scmp.ne.s32.totalorder %s91, %s94
      %p103 = scmp.eq.s32.totalorder %s18, 1
      %p104 = por %p102, %p103
      %p105 = scmp.ne.s32.totalorder %s94, %s95
      %p106 = scmp.eq.s32.totalorder %s18, 0
      %p107 = por %p105, %p106
      %p108 = scmp.ne.s32.totalorder %s94, %s95
      %p109 = scmp.eq.s32.totalorder %s19, 1
      %p110 = por %p108, %p109
      %p112 = scmp.ne.s32.totalorder %s95, %s111
      %p113 = scmp.eq.s32.totalorder %s19, 0
      %p114 = por %p112, %p113
      %p115 = scmp.le.s32.totalorder 1, %s13
      %p116 = scmp.lt.s32.totalorder %s13, 3
      %p117 = pnand %p115, %p116
      %p118 = pneg %p117
      // Predicated region
      $region9: #{tpu_custom_call.1} parent=5 // pred_check
        _
      $region10: #{tpu_custom_call.1} parent=5 // pred_check_branch
        %120 = sbr.rel (%p117) target = $region12
      $region11: #{tpu_custom_call.1} parent=5 // pred_region
        %s121 = ssub.s32 %s13, 1
        // Predicated region
        $region13: #{tpu_custom_call.1} parent=11 // pred_check
          %p122 = pneg %p60
        $region14: #{tpu_custom_call.1} parent=11 // pred_check_branch
          %124 = sbr.rel (%p122) target = $region16
        $region15: #{tpu_custom_call.1} parent=11 // pred_region
          %s126 = ssub.s32 3456, 3456
          %127 = vsyncadd [#allocation3], %s126
          %s128 = sshll.u32 [#allocation2], 4
          %s129 = int_to_ptr.vmem [resolvable:$true] %s128
          %134 = dma.hbm_to_vmem [thread:$0]  %s1, 3456, %s129, [#allocation3], 128, 128, 8
        $region16: #{tpu_custom_call.1} parent=11 // pred_fallthru
          _
        // Predicated region
        $region17: #{tpu_custom_call.1} parent=11 // pred_check
          %p135 = pneg %p81
        $region18: #{tpu_custom_call.1} parent=11 // pred_check_branch
          %137 = sbr.rel (%p135) target = $region20
        $region19: #{tpu_custom_call.1} parent=11 // pred_region
          _
        $region20: #{tpu_custom_call.1} parent=11 // pred_fallthru
          _
      $region12: #{tpu_custom_call.1} parent=5 // pred_fallthru
        _
      %p138 = scmp.lt.s32.totalorder %s13, 2
      // Predicated region
      $region21: #{tpu_custom_call.1} parent=5 // pred_check
        %p139 = pneg %p138
      $region22: #{tpu_custom_call.1} parent=5 // pred_check_branch
        %141 = sbr.rel (%p139) target = $region24
      $region23: #{tpu_custom_call.1} parent=5 // pred_region
        // Predicated region
        $region25: #{tpu_custom_call.1} parent=23 // pred_check
          %p142 = pneg %p33
        $region26: #{tpu_custom_call.1} parent=23 // pred_check_branch
          %144 = sbr.rel (%p142) target = $region28
        $region27: #{tpu_custom_call.1} parent=23 // pred_region
          %p145 = scmp.lt.s32.totalorder %s13, 1
          %s146 = scalar_select %p145, %s13, 1
          %s147 = smul.addr %s146, 3
          %s148 = smul.addr %s147, 8
          %s149 = scalar_lea.vmem %s0, %s148
        $region28: #{tpu_custom_call.1} parent=23 // pred_fallthru
          _
      $region24: #{tpu_custom_call.1} parent=5 // pred_fallthru
        _
      %p150 = scmp.le.s32.totalorder 1, %s13
      %p151 = scmp.lt.s32.totalorder %s13, 3
      %p152 = pnand %p150, %p151
      %p153 = pneg %p152
      // Predicated region
      $region29: #{tpu_custom_call.1} parent=5 // pred_check
        _
      $region30: #{tpu_custom_call.1} parent=5 // pred_check_branch
        %155 = sbr.rel (%p152) target = $region32
      $region31: #{tpu_custom_call.1} parent=5 // pred_region
        %s156 = ssub.s32 %s13, 1
        // Predicated region
        $region33: #{tpu_custom_call.1} parent=31 // pred_check
          %p157 = pneg %p60
        $region34: #{tpu_custom_call.1} parent=31 // pred_check_branch
          %159 = sbr.rel (%p157) target = $region36
        $region35: #{tpu_custom_call.1} parent=31 // pred_region
          %160 = dma.done [#allocation3], 3456
        $region36: #{tpu_custom_call.1} parent=31 // pred_fallthru
          _
        %p161 = scmp.lt.s32.totalorder %s18, 1
        %s162 = scalar_select %p161, %s18, 1
        %s163 = smul.addr %s162, 3
        %s164 = smul.addr %s163, 8
        %s165 = scalar_lea.vmem %s0, %s164
        %p166 = pneg %p39
        %p167 = pneg %p36
        %p168 = pneg %p60
        %p169 = pneg %p57
        %p170 = pneg %p81
        %p171 = pneg %p78
        %p172 = pneg %p107
        %p173 = pneg %p104
        %s174 = sand.u32 %s94, 1
        %s175 = scalar_lea.sflag [#allocation4], %s174
        %s176 = sand.u32 %s94, 1
        %s177 = smul.addr %s176, 16
        %s178 = scalar_lea.vmem [#allocation5], %s177
        %p179 = scmp.lt.s32.totalorder %s18, 1
        %s180 = scalar_select %p179, %s18, 1
        %s181 = smul.addr %s180, 3
        %s182 = smul.addr %s181, 8
        %s183 = scalar_lea.vmem %s0, %s182
        %s184 = smul.u32 2, %s18
        %v185 = vld [vmem:[%s183] sm:$0xff]
        %v186 = vld [vmem:[%s183 + $0x8] sm:$0xff]
        %v187 = vld [vmem:[#allocation2] sm:$0xff]
        %v188 = vld [vmem:[#allocation2 + $0x8] sm:$0xff]
        %v189 = vld [vmem:[#allocation2 + $0x10] sm:$0xff]
        %v190 = vld [vmem:[#allocation2 + $0x18] sm:$0xff]
        %v191 = vld [vmem:[#allocation2 + $0x20] sm:$0xff]
        %v192 = vld [vmem:[#allocation2 + $0x28] sm:$0xff]
        %v193 = vld [vmem:[#allocation2 + $0x30] sm:$0xff]
        %v194 = vld [vmem:[#allocation2 + $0x38] sm:$0xff]
        %v195 = vld [vmem:[#allocation2 + $0x40] sm:$0xff]
        %v196 = vld [vmem:[%s183 + $0x1] sm:$0xff]
        %v197 = vld [vmem:[%s183 + $0x9] sm:$0xff]
        %s198 = scalar_lea.vmem [#allocation2], 72
        %v199 = vld [vmem:[%s198] sm:$0xff]
        %v200 = vld [vmem:[%s198 + $0x8] sm:$0xff]
        %v201 = vld [vmem:[%s198 + $0x10] sm:$0xff]
        %v202 = vld [vmem:[%s198 + $0x18] sm:$0xff]
        %v203 = vld [vmem:[%s198 + $0x20] sm:$0xff]
        %v204 = vld [vmem:[%s198 + $0x28] sm:$0xff]
        %v205 = vld [vmem:[%s198 + $0x30] sm:$0xff]
        %v206 = vld [vmem:[%s198 + $0x38] sm:$0xff]
        %v207 = vld [vmem:[%s198 + $0x40] sm:$0xff]
        %vm208 = vcmask 588800
        %v210 = vsel %vm208, %v196, 0
        %v213 = vsel %vm208, %v197, 0
        %215 = vmatprep.subr.mxu0 0.0
        %216 = vmatpush1.msra.mxu0 %v199
        %217 = vmatprep.subr.mxu0 0.0
        %218 = vmatpush1.msra.mxu0 %v200
        %219 = vmatprep.subr.mxu0 0.0
        %220 = vmatpush1.msra.mxu0 %v201
        %221 = vmatprep.subr.mxu0 0.0
        %222 = vmatpush1.msra.mxu0 %v202
        %223 = vmatprep.subr.mxu0 0.0
        %224 = vmatpush1.msra.mxu0 %v203
        %225 = vmatprep.subr.mxu0 0.0
        %226 = vmatpush1.msra.mxu0 %v204
        %227 = vmatprep.subr.mxu0 0.0
        %228 = vmatpush1.msra.mxu0 %v205
        %229 = vmatprep.subr.mxu0 0.0
        %230 = vmatpush1.msra.mxu0 %v206
        %231 = vmatprep.subr.mxu0 0.0
        %232 = vmatpush1.msra.mxu0 %v207
        %233 = vmatprep.subr.mxu0 0.0
        %234 = vmatpush1.msra.mxu0 0.0
        %235 = vmatprep.subr.mxu0 0.0
        %236 = vmatpush1.msra.mxu0 0.0
        %237 = vmatprep.subr.mxu0 0.0
        %238 = vmatpush1.msra.mxu0 0.0
        %239 = vmatprep.subr.mxu0 0.0
        %240 = vmatpush1.msra.mxu0 0.0
        %241 = vmatprep.subr.mxu0 0.0
        %242 = vmatpush1.msra.mxu0 0.0
        %243 = vmatprep.subr.mxu0 0.0
        %244 = vmatpush1.msra.mxu0 0.0
        %245 = vmatprep.subr.mxu0 0.0
        %246 = vmatpush1.msra.mxu0 0.0
        %247 = vmatprep.subr.mxu0 0.0
        %248 = vmatpush1.msra.mxu0 0.0
        %249 = vmatprep.subr.mxu0 0.0
        %250 = vmatpush1.msra.mxu0 0.0
        %251 = vmatprep.subr.mxu0 0.0
        %252 = vmatpush1.msra.mxu0 0.0
        %253 = vmatprep.subr.mxu0 0.0
        %254 = vmatpush1.msra.mxu0 0.0
        %255 = vmatprep.subr.mxu0 0.0
        %256 = vmatpush1.msra.mxu0 0.0
        %257 = vmatprep.subr.mxu0 0.0
        %258 = vmatpush1.msra.mxu0 0.0
        %259 = vmatprep.subr.mxu0 0.0
        %260 = vmatpush1.msra.mxu0 0.0
        %261 = vmatprep.subr.mxu0 0.0
        %262 = vmatpush1.msra.mxu0 0.0
        %263 = vmatprep.subr.mxu0 0.0
        %264 = vmatpush1.msra.mxu0 0.0
        %265 = vmatprep.subr.mxu0 0.0
        %266 = vmatpush1.msra.mxu0 0.0
        %267 = vmatprep.subr.mxu0 0.0
        %268 = vmatpush1.msra.mxu0 0.0
        %269 = vmatprep.subr.mxu0 0.0
        %270 = vmatpush1.msra.mxu0 0.0
        %271 = vmatprep.subr.mxu0 0.0
        %272 = vmatpush1.msra.mxu0 0.0
        %273 = vmatprep.subr.mxu0 0.0
        %274 = vmatpush1.msra.mxu0 0.0
        %275 = vmatprep.subr.mxu0 0.0
        %276 = vmatpush1.msra.mxu0 0.0
        %277 = vmatprep.subr.mxu0 0.0
        %278 = vmatpush1.msra.mxu0 0.0
        %279 = vmatprep.mubr.f32.mxu0 0.0
        %280 = vmatmul.mubr.f32.gmra.mrb[0].mxu0 %v210
        %v281 = vpop.f32.mrb[0].mxu0
        %v282 = vadd.f32 0.0, %v281
        %v283 = vpop.f32.mrb[0].mxu0
        %284 = vmatprep.mubr.f32.mxu0 0.0
        %285 = vmatmul.mubr.f32.gmra.mrb[0].mxu0 %v213
        %v286 = vpop.f32.mrb[0].mxu0
        %v287 = vadd.f32 0.0, %v286
        %v288 = vpop.f32.mrb[0].mxu0
        %289 = vdwg.mxu0
        %v291 = vsel %vm208, %v185, 0
        %v294 = vsel %vm208, %v186, 0
        %296 = vmatprep.subr.mxu0 0.0
        %297 = vmatpush1.msra.mxu0 %v187
        %298 = vmatprep.subr.mxu0 0.0
        %299 = vmatpush1.msra.mxu0 %v188
        %300 = vmatprep.subr.mxu0 0.0
        %301 = vmatpush1.msra.mxu0 %v189
        %302 = vmatprep.subr.mxu0 0.0
        %303 = vmatpush1.msra.mxu0 %v190
        %304 = vmatprep.subr.mxu0 0.0
        %305 = vmatpush1.msra.mxu0 %v191
        %306 = vmatprep.subr.mxu0 0.0
        %307 = vmatpush1.msra.mxu0 %v192
        %308 = vmatprep.subr.mxu0 0.0
        %309 = vmatpush1.msra.mxu0 %v193
        %310 = vmatprep.subr.mxu0 0.0
        %311 = vmatpush1.msra.mxu0 %v194
        %312 = vmatprep.subr.mxu0 0.0
        %313 = vmatpush1.msra.mxu0 %v195
        %314 = vmatprep.subr.mxu0 0.0
        %315 = vmatpush1.msra.mxu0 0.0
        %316 = vmatprep.subr.mxu0 0.0
        %317 = vmatpush1.msra.mxu0 0.0
        %318 = vmatprep.subr.mxu0 0.0
        %319 = vmatpush1.msra.mxu0 0.0
        %320 = vmatprep.subr.mxu0 0.0
        %321 = vmatpush1.msra.mxu0 0.0
        %322 = vmatprep.subr.mxu0 0.0
        %323 = vmatpush1.msra.mxu0 0.0
        %324 = vmatprep.subr.mxu0 0.0
        %325 = vmatpush1.msra.mxu0 0.0
        %326 = vmatprep.subr.mxu0 0.0
        %327 = vmatpush1.msra.mxu0 0.0
        %328 = vmatprep.subr.mxu0 0.0
        %329 = vmatpush1.msra.mxu0 0.0
        %330 = vmatprep.subr.mxu0 0.0
        %331 = vmatpush1.msra.mxu0 0.0
        %332 = vmatprep.subr.mxu0 0.0
        %333 = vmatpush1.msra.mxu0 0.0
        %334 = vmatprep.subr.mxu0 0.0
        %335 = vmatpush1.msra.mxu0 0.0
        %336 = vmatprep.subr.mxu0 0.0
        %337 = vmatpush1.msra.mxu0 0.0
        %338 = vmatprep.subr.mxu0 0.0
        %339 = vmatpush1.msra.mxu0 0.0
        %340 = vmatprep.subr.mxu0 0.0
        %341 = vmatpush1.msra.mxu0 0.0
        %342 = vmatprep.subr.mxu0 0.0
        %343 = vmatpush1.msra.mxu0 0.0
        %344 = vmatprep.subr.mxu0 0.0
        %345 = vmatpush1.msra.mxu0 0.0
        %346 = vmatprep.subr.mxu0 0.0
        %347 = vmatpush1.msra.mxu0 0.0
        %348 = vmatprep.subr.mxu0 0.0
        %349 = vmatpush1.msra.mxu0 0.0
        %350 = vmatprep.subr.mxu0 0.0
        %351 = vmatpush1.msra.mxu0 0.0
        %352 = vmatprep.subr.mxu0 0.0
        %353 = vmatpush1.msra.mxu0 0.0
        %354 = vmatprep.subr.mxu0 0.0
        %355 = vmatpush1.msra.mxu0 0.0
        %356 = vmatprep.subr.mxu0 0.0
        %357 = vmatpush1.msra.mxu0 0.0
        %358 = vmatprep.subr.mxu0 0.0
        %359 = vmatpush1.msra.mxu0 0.0
        %360 = vmatprep.mubr.f32.mxu0 0.0
        %361 = vmatmul.mubr.f32.gmra.mrb[0].mxu0 %v291
        %v362 = vpop.f32.mrb[0].mxu0
        %v363 = vadd.f32 %v282, %v362
        %v364 = vpop.f32.mrb[0].mxu0
        %365 = vmatprep.mubr.f32.mxu0 0.0
        %366 = vmatmul.mubr.f32.gmra.mrb[0].mxu0 %v294
        %v367 = vpop.f32.mrb[0].mxu0
        %v368 = vadd.f32 %v287, %v367
        %v369 = vpop.f32.mrb[0].mxu0
        %370 = vdwg.mxu0
        %v371 = vld [vmem:[%s183 + $0x2] sm:$0xff]
        %v372 = vld [vmem:[%s183 + $0xa] sm:$0xff]
        %s373 = scalar_lea.vmem [#allocation2], 144
        %v374 = vld [vmem:[%s373] sm:$0xff]
        %v375 = vld [vmem:[%s373 + $0x8] sm:$0xff]
        %v376 = vld [vmem:[%s373 + $0x10] sm:$0xff]
        %v377 = vld [vmem:[%s373 + $0x18] sm:$0xff]
        %v378 = vld [vmem:[%s373 + $0x20] sm:$0xff]
        %v379 = vld [vmem:[%s373 + $0x28] sm:$0xff]
        %v380 = vld [vmem:[%s373 + $0x30] sm:$0xff]
        %v381 = vld [vmem:[%s373 + $0x38] sm:$0xff]
        %v382 = vld [vmem:[%s373 + $0x40] sm:$0xff]
        %v384 = vsel %vm208, %v371, 0
        %v387 = vsel %vm208, %v372, 0
        %389 = vmatprep.subr.mxu0 0.0
        %390 = vmatpush1.msra.mxu0 %v374
        %391 = vmatprep.subr.mxu0 0.0
        %392 = vmatpush1.msra.mxu0 %v375
        %393 = vmatprep.subr.mxu0 0.0
        %394 = vmatpush1.msra.mxu0 %v376
        %395 = vmatprep.subr.mxu0 0.0
        %396 = vmatpush1.msra.mxu0 %v377
        %397 = vmatprep.subr.mxu0 0.0
        %398 = vmatpush1.msra.mxu0 %v378
        %399 = vmatprep.subr.mxu0 0.0
        %400 = vmatpush1.msra.mxu0 %v379
        %401 = vmatprep.subr.mxu0 0.0
        %402 = vmatpush1.msra.mxu0 %v380
        %403 = vmatprep.subr.mxu0 0.0
        %404 = vmatpush1.msra.mxu0 %v381
        %405 = vmatprep.subr.mxu0 0.0
        %406 = vmatpush1.msra.mxu0 %v382
        %407 = vmatprep.subr.mxu0 0.0
        %408 = vmatpush1.msra.mxu0 0.0
        %409 = vmatprep.subr.mxu0 0.0
        %410 = vmatpush1.msra.mxu0 0.0
        %411 = vmatprep.subr.mxu0 0.0
        %412 = vmatpush1.msra.mxu0 0.0
        %413 = vmatprep.subr.mxu0 0.0
        %414 = vmatpush1.msra.mxu0 0.0
        %415 = vmatprep.subr.mxu0 0.0
        %416 = vmatpush1.msra.mxu0 0.0
        %417 = vmatprep.subr.mxu0 0.0
        %418 = vmatpush1.msra.mxu0 0.0
        %419 = vmatprep.subr.mxu0 0.0
        %420 = vmatpush1.msra.mxu0 0.0
        %421 = vmatprep.subr.mxu0 0.0
        %422 = vmatpush1.msra.mxu0 0.0
        %423 = vmatprep.subr.mxu0 0.0
        %424 = vmatpush1.msra.mxu0 0.0
        %425 = vmatprep.subr.mxu0 0.0
        %426 = vmatpush1.msra.mxu0 0.0
        %427 = vmatprep.subr.mxu0 0.0
        %428 = vmatpush1.msra.mxu0 0.0
        %429 = vmatprep.subr.mxu0 0.0
        %430 = vmatpush1.msra.mxu0 0.0
        %431 = vmatprep.subr.mxu0 0.0
        %432 = vmatpush1.msra.mxu0 0.0
        %433 = vmatprep.subr.mxu0 0.0
        %434 = vmatpush1.msra.mxu0 0.0
        %435 = vmatprep.subr.mxu0 0.0
        %436 = vmatpush1.msra.mxu0 0.0
        %437 = vmatprep.subr.mxu0 0.0
        %438 = vmatpush1.msra.mxu0 0.0
        %439 = vmatprep.subr.mxu0 0.0
        %440 = vmatpush1.msra.mxu0 0.0
        %441 = vmatprep.subr.mxu0 0.0
        %442 = vmatpush1.msra.mxu0 0.0
        %443 = vmatprep.subr.mxu0 0.0
        %444 = vmatpush1.msra.mxu0 0.0
        %445 = vmatprep.subr.mxu0 0.0
        %446 = vmatpush1.msra.mxu0 0.0
        %447 = vmatprep.subr.mxu0 0.0
        %448 = vmatpush1.msra.mxu0 0.0
        %449 = vmatprep.subr.mxu0 0.0
        %450 = vmatpush1.msra.mxu0 0.0
        %451 = vmatprep.subr.mxu0 0.0
        %452 = vmatpush1.msra.mxu0 0.0
        %453 = vmatprep.mubr.f32.mxu0 0.0
        %454 = vmatmul.mubr.f32.gmra.mrb[0].mxu0 %v384
        %v455 = vpop.f32.mrb[0].mxu0
        %v456 = vadd.f32 0.0, %v455
        %v457 = vpop.f32.mrb[0].mxu0
        %458 = vmatprep.mubr.f32.mxu0 0.0
        %459 = vmatmul.mubr.f32.gmra.mrb[0].mxu0 %v387
        %v460 = vpop.f32.mrb[0].mxu0
        %v461 = vadd.f32 0.0, %v460
        %v462 = vpop.f32.mrb[0].mxu0
        %463 = vdwg.mxu0
        %v464 = vadd.f32 %v363, %v456
        %v465 = vadd.f32 %v368, %v461
        %v466 = vld [vmem:[%s2] sm:$0x1]
        %v468 = vlaneseq
        %v469 = vshrl.u32 %v468, 7
        %v470 = vsub.s32 0, %v469
        %v471 = vrot.slane %v466, %v470
        %v473 = vadd.f32 %v464, %v471
        %v474 = vadd.f32 %v465, %v471
        %475 = vst [vmem:[%s178] sm:$0xff] %v473
        %476 = vst [vmem:[%s178 + $0x8] sm:$0xff] %v474
        %s477 = sand.u32 %s94, 1
        %s478 = scalar_lea.sflag [#allocation4], %s477
        %s479 = sand.u32 %s94, 1
        %s480 = smul.addr %s479, 16
        %s481 = scalar_lea.vmem [#allocation5], %s480
        // Predicated region
        $region37: #{tpu_custom_call.1} parent=31 // pred_check
          %p482 = pneg %p104
        $region38: #{tpu_custom_call.1} parent=31 // pred_check_branch
          %484 = sbr.rel (%p482) target = $region40
        $region39: #{tpu_custom_call.1} parent=31 // pred_region
          %s485 = smul.u32 2, %s18
          %s487 = ssub.s32 256, 256
          %488 = vsyncadd %s478, %s487
          %s489 = smul.addr %s485, 128
          %s490 = scalar_lea.hbm %s3, %s489
          %s491 = sshll.u32 %s481, 4
          %s492 = int_to_ptr.vmem [resolvable:$true] %s491
          %497 = dma.vmem_to_hbm [thread:$0]  %s492, 256, %s490, %s478, 128, 128, 8
        $region40: #{tpu_custom_call.1} parent=31 // pred_fallthru
          _
      $region32: #{tpu_custom_call.1} parent=5 // pred_fallthru
        _
      %p498 = scmp.le.s32.totalorder 2, %s13
      // Predicated region
      $region41: #{tpu_custom_call.1} parent=5 // pred_check
        %p499 = pneg %p498
      $region42: #{tpu_custom_call.1} parent=5 // pred_check_branch
        %501 = sbr.rel (%p499) target = $region44
      $region43: #{tpu_custom_call.1} parent=5 // pred_region
        %s502 = ssub.s32 %s13, 2
        // Predicated region
        $region45: #{tpu_custom_call.1} parent=43 // pred_check
          %p503 = pneg %p110
        $region46: #{tpu_custom_call.1} parent=43 // pred_check_branch
          %505 = sbr.rel (%p503) target = $region48
        $region47: #{tpu_custom_call.1} parent=43 // pred_region
          %s506 = sand.u32 %s95, 1
          %s507 = scalar_lea.sflag [#allocation4], %s506
          %s508 = sand.u32 %s95, 1
          %s509 = smul.addr %s508, 16
          %s510 = scalar_lea.vmem [#allocation5], %s509
          %511 = dma.done %s507, 256
        $region48: #{tpu_custom_call.1} parent=43 // pred_fallthru
          _
      $region44: #{tpu_custom_call.1} parent=5 // pred_fallthru
        _
    $region6: #{tpu_custom_call.1} parent=1 // loop_footer
      %s17 = sadd.s32 1, %s13
    $region7: #{tpu_custom_call.1} parent=1 // loop_footer_branch
      %12 = sbr.rel target = $region3
    $region8: #{tpu_custom_call.1} parent=1 // loop_exit
      _
    %512 = vsyncpa [#allocation3], 1
    %s513 = scalar_lea.sflag [#allocation3], 1
    %514 = vsyncpa %s513, 1
    %515 = vsyncpa [#allocation4], 1
    %s516 = scalar_lea.sflag [#allocation4], 1
    %517 = vsyncpa %s516, 1

</llo_original>
